<compile_context>
chip_gen: v7x
topology: tpu7x:2x2x1
jax: 0.10.0
libtpu: 0.0.40
codegen_flags: <defaults>
</compile_context>

<pallas_src>
import math

import jax
import jax.numpy as jnp
from jax import lax
from jax.experimental import pallas as pl
from jax.experimental.pallas import tpu as pltpu


def _prompts_kernel(x_ref, tf_ref, out_ref):
    # x_ref:   (TB, D)  image-feature tile (bf16 or f32)
    # tf_ref:  (C,  D)  pre-normalized, pre-scaled text features (same dtype as x)
    # out_ref: (C, TB)  f32 softmax probabilities, transposed so the lane dim is TB
    # (C, TB) = tf @ x.T : contract over D, accumulate in f32 on the MXU.
    logits = lax.dot_general(
        tf_ref[...], x_ref[...],
        dimension_numbers=(((1,), (1,)), ((), ())),
        preferred_element_type=jnp.float32,
    )
    # numerically-stable softmax over the class axis (axis 0, C entries), all in f32
    m = jnp.max(logits, axis=0, keepdims=True)
    e = jnp.exp(logits - m)
    out_ref[...] = e / jnp.sum(e, axis=0, keepdims=True)


def prompts_forward(x, text_features, logit_scale, *, block_b=1024, use_bf16=True):
    """x: (B, D), text_features: (C, D), logit_scale: scalar.

    Returns a 1-D array of shape (B * C,), matching torch.cat of the per-sample
    1-D softmax results along dim 0.
    """
    B, D = x.shape
    C, D2 = text_features.shape
    assert D == D2
    assert block_b % 128 == 0, "block_b must be lane/sublane aligned"

    # Fold L2 normalization and exp(logit_scale) into the text features ONCE, in f32,
    # outside the grid (avoids per-tile norm/sqrt and per-tile logit scaling).
    tf32 = text_features.astype(jnp.float32)
    norm = jnp.sqrt(jnp.sum(tf32 * tf32, axis=-1, keepdims=True))
    tf_scaled = jnp.exp(logit_scale).astype(jnp.float32) * (tf32 / norm)

    compute_dtype = jnp.bfloat16 if use_bf16 else jnp.float32
    tf_scaled = tf_scaled.astype(compute_dtype)
    x_c = x.astype(compute_dtype)

    # Batch tiling: large lane-dense tiles; pad B up to a tile multiple when needed.
    if B <= block_b:
        tb = B                      # single full-extent block (always layout-legal)
        b_pad = B
    else:
        tb = block_b                # multiple of 8 and 128 -> legal block shape
        b_pad = pl.cdiv(B, tb) * tb
        if b_pad != B:
            x_c = jnp.pad(x_c, ((0, b_pad - B), (0, 0)))  # padded rows sliced off below

    grid = (b_pad // tb,)

    probs_t = pl.pallas_call(
        _prompts_kernel,
        out_shape=jax.ShapeDtypeStruct((C, b_pad), jnp.float32),
        grid=grid,
        in_specs=[
            pl.BlockSpec((tb, D), lambda i: (i, 0)),   # image-feature tile (pipelined)
            pl.BlockSpec((C, D), lambda i: (0, 0)),    # text features (tiny, resident)
        ],
        # transposed output block: lane dim = tb (>=128 for large B) -> dense stores
        out_specs=pl.BlockSpec((C, tb), lambda i: (0, i)),
        compiler_params=pltpu.CompilerParams(
            dimension_semantics=("parallel",),         # rows independent -> megacore on v7x
        ),
    )(x_c, tf_scaled)

    # (C, B_pad) -> (B, C) -> flatten, matching torch.cat of per-row (C,) results.
    return probs_t.T[:B].reshape(B * C)


def _prompts_reference(x, text_features, logit_scale):
    tf = text_features.astype(jnp.float32)
    norm = jnp.sqrt(jnp.sum(tf * tf, axis=-1, keepdims=True))
    logits = jnp.exp(logit_scale) * (x.astype(jnp.float32) @ (tf / norm).T)
    return jax.nn.softmax(logits, axis=-1).reshape(-1)


if __name__ == "__main__":
    key = jax.random.PRNGKey(0)
    k_tf, k_x1, k_x2 = jax.random.split(key, 3)

    C, D = 2, 512  # fixed by the module's (2, 512) text_features parameter

    # Xavier-normal init for text_features: std = sqrt(2 / (fan_in + fan_out))
    xavier_std = math.sqrt(2.0 / (C + D))
    text_features = xavier_std * jax.random.normal(k_tf, (C, D), dtype=jnp.float32)

    # CLIP's logit_scale is initialized to ln(1/0.07); forward uses exp().
    logit_scale = jnp.float32(math.log(1.0 / 0.07))

    # 1) Small batch: single full-extent block, exact f32 path.
    B1 = 8
    x_small = jax.random.normal(k_x1, (B1, D), dtype=jnp.float32)
    out_f32 = jax.block_until_ready(
        prompts_forward(x_small, text_features, logit_scale, use_bf16=False))
    ref_small = _prompts_reference(x_small, text_features, logit_scale)
    assert out_f32.shape == (B1 * C,)
    assert jnp.allclose(out_f32, ref_small, atol=1e-5), float(jnp.max(jnp.abs(out_f32 - ref_small)))
    assert jnp.allclose(out_f32.reshape(B1, C).sum(-1), 1.0, atol=1e-5)

    # 2) Larger batch exercising the tiled / padded / bf16 fast path (grid of 3 tiles).
    B2 = 260
    x_big = jax.random.normal(k_x2, (B2, D), dtype=jnp.float32)
    out_bf16 = jax.block_until_ready(
        prompts_forward(x_big, text_features, logit_scale, block_b=128, use_bf16=True))
    ref_big = _prompts_reference(x_big, text_features, logit_scale)
    assert out_bf16.shape == (B2 * C,)
    assert jnp.allclose(out_bf16, ref_big, atol=5e-2), float(jnp.max(jnp.abs(out_bf16 - ref_big)))
    assert jnp.allclose(out_bf16.reshape(B2, C).sum(-1), 1.0, atol=1e-5)

    print("KERNEL_OK")
</pallas_src>

<mosaic_0001>
module attributes {stable_mosaic.version = 11 : i64} {
  func.func @_prompts_kernel(%arg0: i32, %arg1: memref<8x512xf32, #tpu.memory_space<vmem>>, %arg2: memref<2x512xf32, #tpu.memory_space<vmem>>, %arg3: memref<2x8xf32, #tpu.memory_space<vmem>>) attributes {dimension_semantics = [#tpu.dimension_semantics<parallel>], iteration_bounds = array<i64: 1>, scalar_prefetch = 0 : i64, scratch_operands = 0 : i64, tpu.core_type = #tpu.core_type<tc>, window_params = [{transform_indices = @transform_0, window_bounds = array<i64: 8, 512>}, {pipeline_mode = #tpu.pipeline_mode<synchronous>, transform_indices = @transform_1, window_bounds = array<i64: 2, 512>}, {transform_indices = @transform_2, window_bounds = array<i64: 2, 8>}]} {
    %c0 = arith.constant 0 : index
    %c0_0 = arith.constant 0 : index
    %0 = vector.load %arg2[%c0, %c0_0] : memref<2x512xf32, #tpu.memory_space<vmem>>, vector<2x512xf32>
    %c0_1 = arith.constant 0 : index
    %c0_2 = arith.constant 0 : index
    %1 = vector.load %arg1[%c0_1, %c0_2] : memref<8x512xf32, #tpu.memory_space<vmem>>, vector<8x512xf32>
    %cst = arith.constant dense<0.000000e+00> : vector<2x8xf32>
    %2 = tpu.matmul %0, %1, %cst {dimension_numbers = #tpu.dot_dimension_numbers<[1], [1], [0], [0], [0, 0, 1, 0], [], []>} : vector<2x512xf32>, vector<8x512xf32>, vector<2x8xf32> -> vector<2x8xf32>
    %cst_3 = arith.constant dense<0xFF800000> : vector<8xf32>
    %3 = vector.multi_reduction <maximumf>, %2, %cst_3 [0] : vector<2x8xf32> to vector<8xf32>
    %4 = vector.shape_cast %3 : vector<8xf32> to vector<1x8xf32>
    %5 = vector.broadcast %4 : vector<1x8xf32> to vector<2x8xf32>
    %6 = arith.subf %2, %5 : vector<2x8xf32>
    %7 = math.exp %6 : vector<2x8xf32>
    %cst_4 = arith.constant dense<0.000000e+00> : vector<8xf32>
    %8 = vector.multi_reduction <add>, %7, %cst_4 [0] : vector<2x8xf32> to vector<8xf32>
    %9 = vector.shape_cast %8 : vector<8xf32> to vector<1x8xf32>
    %10 = vector.broadcast %9 : vector<1x8xf32> to vector<2x8xf32>
    %11 = arith.divf %7, %10 : vector<2x8xf32>
    %c0_5 = arith.constant 0 : index
    %c0_6 = arith.constant 0 : index
    %12 = vector.load %arg3[%c0_5, %c0_6] : memref<2x8xf32, #tpu.memory_space<vmem>>, vector<2x8xf32>
    tpu.vector_store %arg3[%c0_5, %c0_6], %11 {strides = array<i32>} : memref<2x8xf32, #tpu.memory_space<vmem>>, vector<2x8xf32>,
    return
  }
  func.func @transform_0(%arg0: i32) -> (i32, i32) {
    %c0_i32 = arith.constant 0 : i32
    %c0_i32_0 = arith.constant 0 : i32
    return %arg0, %c0_i32 : i32, i32
  }
  func.func @transform_1(%arg0: i32) -> (i32, i32) {
    %c0_i32 = arith.constant 0 : i32
    %c0_i32_0 = arith.constant 0 : i32
    %c0_i32_1 = arith.constant 0 : i32
    return %c0_i32, %c0_i32_0 : i32, i32
  }
  func.func @transform_2(%arg0: i32) -> (i32, i32) {
    %c0_i32 = arith.constant 0 : i32
    %c0_i32_0 = arith.constant 0 : i32
    return %c0_i32, %arg0 : i32, i32
  }
}

</mosaic_0001>

<llo_original>
// kernel: tpu_custom_call.1
$region0: #{tpu_custom_call.1}
  #allocation0 [shape = 'u32[]', space=smem, size = 0x4, offset = 0x4, fixed_abs, tag = 'smem constant byte address 0x4 - core index']
  #allocation1 [shape = 'u32[144,128]{1,0:T(1,128)}', space=vmem, size = 0x12000, scoped, tag = 'internal scratch']
  %s0 = inlined_call_operand.hbm [shape: f32[8,512], index: 0, kind: input, shape index: {}]
  %s1 = inlined_call_operand.hbm [shape: f32[2,512], index: 1, kind: input, shape index: {}]
  %s2 = inlined_call_operand.hbm [shape: f32[2,8], index: 2, kind: output, shape index: {}]
  %s3 = sld [smem:[#allocation0]]
  $region26: #{tpu_custom_call.1} parent=0
    _
  %s5 = ssub.s32 1, %s3
  %s6 = scalar_select 0, %s5, %s3
  $region1: #{tpu_custom_call.1} parent=0
    #allocation2 [shape = 'u8[16384]{0}', space=vmem, size = 0x4000, scoped, tag = 'input window, operand 0, single buffered']
    #allocation3 [shape = 's32[1]{0}', space=sflag, size = 0x4, scoped, tag = 'scoped memory for tpu_custom_call.1']
    #allocation4 [shape = 's32[1]{0}', space=sflag, size = 0x4, scoped, tag = 'scoped memory for tpu_custom_call.1']
    #allocation5 [shape = 'u8[4096]{0}', space=vmem, size = 0x1000, scoped, tag = 'input window, operand 1, single buffered']
    #allocation6 [shape = 's32[1]{0}', space=sflag, size = 0x4, scoped, tag = 'scoped memory for tpu_custom_call.1']
    #allocation7 [shape = 'u8[1024]{0}', space=vmem, size = 0x400, scoped, tag = 'output window, operand 0, single buffered']
    %7 = vsyncpa [#allocation3], 0
    %8 = vsyncpa [#allocation6], 0
    %9 = vsyncpa [#allocation4], 0
    // Predicated region
    $region2: #{tpu_custom_call.1} parent=1 // pred_check
      _
    $region3: #{tpu_custom_call.1} parent=1 // pred_check_branch
      %11 = sbr.rel (0) target = $region5
    $region4: #{tpu_custom_call.1} parent=1 // pred_region
      %s13 = ssub.s32 512, 512
      %14 = vsyncadd [#allocation3], %s13
      %s16 = sshll.u32 [#allocation2], 4
      %s17 = int_to_ptr.vmem [resolvable:$true] %s16
      %19 = dma.hbm_to_vmem [thread:$0]  %s0, 512, %s17, [#allocation3]
    $region5: #{tpu_custom_call.1} parent=1 // pred_fallthru
      _
    // Predicated region
    $region6: #{tpu_custom_call.1} parent=1 // pred_check
      _
    $region7: #{tpu_custom_call.1} parent=1 // pred_check_branch
      %21 = sbr.rel (0) target = $region9
    $region8: #{tpu_custom_call.1} parent=1 // pred_region
      %s23 = ssub.s32 128, 128
      %24 = vsyncadd [#allocation6], %s23
      %s26 = sshll.u32 [#allocation5], 4
      %s27 = int_to_ptr.vmem [resolvable:$true] %s26
      %29 = dma.hbm_to_vmem [thread:$0]  %s1, 128, %s27, [#allocation6]
    $region9: #{tpu_custom_call.1} parent=1 // pred_fallthru
      _
    // Predicated region
    $region10: #{tpu_custom_call.1} parent=1 // pred_check
      _
    $region11: #{tpu_custom_call.1} parent=1 // pred_check_branch
      %31 = sbr.rel (0) target = $region13
    $region12: #{tpu_custom_call.1} parent=1 // pred_region
      %32 = dma.done [#allocation3], 512
    $region13: #{tpu_custom_call.1} parent=1 // pred_fallthru
      _
    // Predicated region
    $region14: #{tpu_custom_call.1} parent=1 // pred_check
      _
    $region15: #{tpu_custom_call.1} parent=1 // pred_check_branch
      %34 = sbr.rel (0) target = $region17
    $region16: #{tpu_custom_call.1} parent=1 // pred_region
      %35 = dma.done [#allocation6], 128
    $region17: #{tpu_custom_call.1} parent=1 // pred_fallthru
      _
    %v36 = vld [vmem:[#allocation5] sm:$0xff]
    %v37 = vld [vmem:[#allocation2] sm:$0xff]
    %v38 = vld [vmem:[#allocation2 + $0x8] sm:$0xff]
    %v39 = vld [vmem:[#allocation2 + $0x10] sm:$0xff]
    %v40 = vld [vmem:[#allocation2 + $0x18] sm:$0xff]
    %v42 = vcombine.high %v36, %v36
    %v44 = vunpack.c.l.s4 1983009808
    %v45 = vunpack.c.0.s8 %v44
    %v46 = vlaneseq
    %v47 = vshrl.u32 %v46, 7
    %v48 = vsub.s32 %v45, %v47
    %v49 = vrot.slane %v36, %v48
    %v51 = vunpack.c.l.s4 1983009808
    %v52 = vunpack.c.0.s8 %v51
    %v53 = vlaneseq
    %v54 = vshrl.u32 %v53, 7
    %v55 = vsub.s32 %v52, %v54
    %v56 = vrot.slane %v42, %v55
    %v57 = vcombine.high %v49, %v49
    %v58 = vcombine.high %v56, %v56
    %63 = vmatprep.subr.mxu0 %v38
    %64 = vmatpush1.xpose.msra.mxu0 %v37
    %65 = vmatprep.subr.mxu0 0.0
    %66 = vmatpush1.xpose.msra.mxu0 0.0
    %67 = vmatprep.subr.mxu0 0.0
    %68 = vmatpush1.xpose.msra.mxu0 0.0
    %69 = vmatprep.subr.mxu0 0.0
    %70 = vmatpush1.xpose.msra.mxu0 0.0
    %71 = vmatprep.subr.mxu0 0.0
    %72 = vmatpush1.xpose.msra.mxu0 0.0
    %73 = vmatprep.subr.mxu0 0.0
    %74 = vmatpush1.xpose.msra.mxu0 0.0
    %75 = vmatprep.subr.mxu0 0.0
    %76 = vmatpush1.xpose.msra.mxu0 0.0
    %77 = vmatprep.subr.mxu0 0.0
    %78 = vmatpush1.xpose.msra.mxu0 0.0
    %79 = vmatprep.subr.mxu0 0.0
    %80 = vmatpush1.xpose.msra.mxu0 0.0
    %81 = vmatprep.subr.mxu0 0.0
    %82 = vmatpush1.xpose.msra.mxu0 0.0
    %83 = vmatprep.subr.mxu0 0.0
    %84 = vmatpush1.xpose.msra.mxu0 0.0
    %85 = vmatprep.subr.mxu0 0.0
    %86 = vmatpush1.xpose.msra.mxu0 0.0
    %87 = vmatprep.subr.mxu0 0.0
    %88 = vmatpush1.xpose.msra.mxu0 0.0
    %89 = vmatprep.subr.mxu0 0.0
    %90 = vmatpush1.xpose.msra.mxu0 0.0
    %91 = vmatprep.subr.mxu0 0.0
    %92 = vmatpush1.xpose.msra.mxu0 0.0
    %93 = vmatprep.subr.mxu0 0.0
    %94 = vmatpush1.xpose.msra.mxu0 0.0
    %95 = vmatprep.subr.mxu0 0.0
    %96 = vmatpush1.xpose.msra.mxu0 0.0
    %97 = vmatprep.subr.mxu0 0.0
    %98 = vmatpush1.xpose.msra.mxu0 0.0
    %99 = vmatprep.subr.mxu0 0.0
    %100 = vmatpush1.xpose.msra.mxu0 0.0
    %101 = vmatprep.subr.mxu0 0.0
    %102 = vmatpush1.xpose.msra.mxu0 0.0
    %103 = vmatprep.subr.mxu0 0.0
    %104 = vmatpush1.xpose.msra.mxu0 0.0
    %105 = vmatprep.subr.mxu0 0.0
    %106 = vmatpush1.xpose.msra.mxu0 0.0
    %107 = vmatprep.subr.mxu0 0.0
    %108 = vmatpush1.xpose.msra.mxu0 0.0
    %109 = vmatprep.subr.mxu0 0.0
    %110 = vmatpush1.xpose.msra.mxu0 0.0
    %111 = vmatprep.subr.mxu0 0.0
    %112 = vmatpush1.xpose.msra.mxu0 0.0
    %113 = vmatprep.subr.mxu0 0.0
    %114 = vmatpush1.xpose.msra.mxu0 0.0
    %115 = vmatprep.subr.mxu0 0.0
    %116 = vmatpush1.xpose.msra.mxu0 0.0
    %117 = vmatprep.subr.mxu0 0.0
    %118 = vmatpush1.xpose.msra.mxu0 0.0
    %119 = vmatprep.subr.mxu0 0.0
    %120 = vmatpush1.xpose.msra.mxu0 0.0
    %121 = vmatprep.subr.mxu0 0.0
    %122 = vmatpush1.xpose.msra.mxu0 0.0
    %123 = vmatprep.subr.mxu0 0.0
    %124 = vmatpush1.xpose.msra.mxu0 0.0
    %125 = vmatprep.subr.mxu0 0.0
    %126 = vmatpush1.xpose.msra.mxu0 0.0
    %127 = vmatprep.mubr.f32.mxu0 %v57
    %128 = vmatmul.mubr.f32.gmra.mrb[0].mxu0 %v49
    %v129 = vpop.f32.mrb[0].mxu0
    %v130 = vadd.f32 0.0, %v129
    %v131 = vpop.f32.mrb[0].mxu0
    %132 = vdwg.mxu0
    %133 = vmatprep.subr.mxu0 %v40
    %134 = vmatpush1.xpose.msra.mxu0 %v39
    %135 = vmatprep.subr.mxu0 0.0
    %136 = vmatpush1.xpose.msra.mxu0 0.0
    %137 = vmatprep.subr.mxu0 0.0
    %138 = vmatpush1.xpose.msra.mxu0 0.0
    %139 = vmatprep.subr.mxu0 0.0
    %140 = vmatpush1.xpose.msra.mxu0 0.0
    %141 = vmatprep.subr.mxu0 0.0
    %142 = vmatpush1.xpose.msra.mxu0 0.0
    %143 = vmatprep.subr.mxu0 0.0
    %144 = vmatpush1.xpose.msra.mxu0 0.0
    %145 = vmatprep.subr.mxu0 0.0
    %146 = vmatpush1.xpose.msra.mxu0 0.0
    %147 = vmatprep.subr.mxu0 0.0
    %148 = vmatpush1.xpose.msra.mxu0 0.0
    %149 = vmatprep.subr.mxu0 0.0
    %150 = vmatpush1.xpose.msra.mxu0 0.0
    %151 = vmatprep.subr.mxu0 0.0
    %152 = vmatpush1.xpose.msra.mxu0 0.0
    %153 = vmatprep.subr.mxu0 0.0
    %154 = vmatpush1.xpose.msra.mxu0 0.0
    %155 = vmatprep.subr.mxu0 0.0
    %156 = vmatpush1.xpose.msra.mxu0 0.0
    %157 = vmatprep.subr.mxu0 0.0
    %158 = vmatpush1.xpose.msra.mxu0 0.0
    %159 = vmatprep.subr.mxu0 0.0
    %160 = vmatpush1.xpose.msra.mxu0 0.0
    %161 = vmatprep.subr.mxu0 0.0
    %162 = vmatpush1.xpose.msra.mxu0 0.0
    %163 = vmatprep.subr.mxu0 0.0
    %164 = vmatpush1.xpose.msra.mxu0 0.0
    %165 = vmatprep.subr.mxu0 0.0
    %166 = vmatpush1.xpose.msra.mxu0 0.0
    %167 = vmatprep.subr.mxu0 0.0
    %168 = vmatpush1.xpose.msra.mxu0 0.0
    %169 = vmatprep.subr.mxu0 0.0
    %170 = vmatpush1.xpose.msra.mxu0 0.0
    %171 = vmatprep.subr.mxu0 0.0
    %172 = vmatpush1.xpose.msra.mxu0 0.0
    %173 = vmatprep.subr.mxu0 0.0
    %174 = vmatpush1.xpose.msra.mxu0 0.0
    %175 = vmatprep.subr.mxu0 0.0
    %176 = vmatpush1.xpose.msra.mxu0 0.0
    %177 = vmatprep.subr.mxu0 0.0
    %178 = vmatpush1.xpose.msra.mxu0 0.0
    %179 = vmatprep.subr.mxu0 0.0
    %180 = vmatpush1.xpose.msra.mxu0 0.0
    %181 = vmatprep.subr.mxu0 0.0
    %182 = vmatpush1.xpose.msra.mxu0 0.0
    %183 = vmatprep.subr.mxu0 0.0
    %184 = vmatpush1.xpose.msra.mxu0 0.0
    %185 = vmatprep.subr.mxu0 0.0
    %186 = vmatpush1.xpose.msra.mxu0 0.0
    %187 = vmatprep.subr.mxu0 0.0
    %188 = vmatpush1.xpose.msra.mxu0 0.0
    %189 = vmatprep.subr.mxu0 0.0
    %190 = vmatpush1.xpose.msra.mxu0 0.0
    %191 = vmatprep.subr.mxu0 0.0
    %192 = vmatpush1.xpose.msra.mxu0 0.0
    %193 = vmatprep.subr.mxu0 0.0
    %194 = vmatpush1.xpose.msra.mxu0 0.0
    %195 = vmatprep.subr.mxu0 0.0
    %196 = vmatpush1.xpose.msra.mxu0 0.0
    %197 = vmatprep.mubr.f32.mxu0 %v58
    %198 = vmatmul.mubr.f32.gmra.mrb[0].mxu0 %v56
    %v199 = vpop.f32.mrb[0].mxu0
    %v200 = vadd.f32 %v130, %v199
    %v201 = vpop.f32.mrb[0].mxu0
    %202 = vdwg.mxu0
    %vm203 = vcmask 58368
    %v204 = vsel %vm203, %v200, -inf
    %v205 = vrot.slane %v204, 4
    %v206 = vmax.f32 %v204, %v205
    %v207 = vrot.slane %v206, 2
    %v208 = vmax.f32 %v206, %v207
    %v209 = vrot.slane %v208, 1
    %v210 = vmax.f32 %v208, %v209
    %v211 = vsub.f32 %v200, %v210
    %v212 = vmul.f32 %v211, 1.442695
    %v213 = vpow.pop %v212
    %v214 = vsel %vm203, %v213, 0.0
    %v215 = vrot.slane %v214, 4
    %v216 = vadd.f32 %v214, %v215
    %v217 = vrot.slane %v216, 2
    %v218 = vadd.f32 %v216, %v217
    %v219 = vrot.slane %v218, 1
    %v220 = vadd.f32 %v218, %v219
    %v221 = vrcp.pop %v220
    %v222 = vmul.f32 %v213, %v221
    %223 = vst.msk [vmem:[#allocation7] sm:$0x3] %vm203, %v222
    // Predicated region
    $region18: #{tpu_custom_call.1} parent=1 // pred_check
      _
    $region19: #{tpu_custom_call.1} parent=1 // pred_check_branch
      %225 = sbr.rel (0) target = $region21
    $region20: #{tpu_custom_call.1} parent=1 // pred_region
      %s227 = ssub.s32 32, 32
      %228 = vsyncadd [#allocation4], %s227
      %s230 = sshll.u32 [#allocation7], 4
      %s231 = int_to_ptr.vmem [resolvable:$true] %s230
      %233 = dma.vmem_to_hbm [thread:$0]  %s231, 32, %s2, [#allocation4]
    $region21: #{tpu_custom_call.1} parent=1 // pred_fallthru
      _
    // Predicated region
    $region22: #{tpu_custom_call.1} parent=1 // pred_check
      _
    $region23: #{tpu_custom_call.1} parent=1 // pred_check_branch
      %235 = sbr.rel (0) target = $region25
    $region24: #{tpu_custom_call.1} parent=1 // pred_region
      %236 = dma.done [#allocation4], 32
    $region25: #{tpu_custom_call.1} parent=1 // pred_fallthru
      _
    %237 = vsyncpa [#allocation3], 1
    %238 = vsyncpa [#allocation6], 1
    %239 = vsyncpa [#allocation4], 1

</llo_original>
